<compile_context>
chip_gen: v7x
topology: tpu7x:2x2x1
jax: 0.10.0
libtpu: 0.0.40
codegen_flags: <defaults>
</compile_context>

<pallas_src>
import jax
import jax.numpy as jnp
import numpy as np
from jax.experimental import pallas as pl
from jax.experimental.pallas import tpu as pltpu

_TARGET_BLOCK_BYTES = 4 * 1024 * 1024          # ~4 MiB/block; 4 buffers fit 32 MiB VMEM
_VMEM_LIMIT_BYTES = 32 * 1024 * 1024           # safe on v5e / v6e / v7x
_LANE_CANDIDATES = (4096, 2048, 1024, 512, 256, 128)


def _identity_kernel(x_ref, o_ref):
    # IdentityModule.forward is a pure passthrough -> VMEM copy.
    o_ref[...] = x_ref[...]


def _copy_slab(slab: jax.Array, block_rows: int, lane: int) -> jax.Array:
    rows = slab.shape[0]
    return pl.pallas_call(
        _identity_kernel,
        out_shape=jax.ShapeDtypeStruct(slab.shape, slab.dtype),
        grid_spec=pltpu.PrefetchScalarGridSpec(
            num_scalar_prefetch=0,
            grid=(pl.cdiv(rows, block_rows),),
            in_specs=[pl.BlockSpec((block_rows, lane), lambda i: (i, 0))],
            out_specs=pl.BlockSpec((block_rows, lane), lambda i: (i, 0)),
        ),
        # Write the output in place over the input buffer (with donation the
        # identity costs a single read+write of the same HBM buffer).
        input_output_aliases={0: 0},
        compiler_params=pltpu.CompilerParams(
            dimension_semantics=("parallel",),
            vmem_limit_bytes=_VMEM_LIMIT_BYTES,
        ),
    )(slab)


def _sublane_for(dtype) -> int:
    # Native TPU tile rows: 8 (32-bit), 16 (16-bit), 32 (8-bit) dtypes.
    return max(8, 32 // jnp.dtype(dtype).itemsize)


def _target_block_rows(lane: int, itemsize: int, sublane: int) -> int:
    rows = (_TARGET_BLOCK_BYTES // (lane * itemsize) // sublane) * sublane
    return max(sublane, rows)


def _identity_forward_impl(x: jax.Array) -> jax.Array:
    n = x.size
    if n == 0:
        return x

    itemsize = jnp.dtype(x.dtype).itemsize
    sublane = _sublane_for(x.dtype)

    if n % 128 == 0:
        # Fast path: metadata-only reshape to a lane-dense 2-D slab (no pad).
        lane = next(L for L in _LANE_CANDIDATES if n % L == 0)
        rows = n // lane
        target_rows = _target_block_rows(lane, itemsize, sublane)
        if rows % sublane == 0:
            block_rows = min(rows, target_rows)      # multiple of sublane
        elif rows <= target_rows:
            block_rows = rows                        # block == full array dims
        else:
            block_rows = target_rows                 # ragged last block masked by Pallas
        out = _copy_slab(x.reshape(rows, lane), block_rows, lane)
        return out.reshape(x.shape)

    if n * itemsize <= _TARGET_BLOCK_BYTES:
        # Small misaligned input: single full-array block, still no pad/slice.
        out = _copy_slab(x.reshape(1, n), 1, n)
        return out.reshape(x.shape)

    # Rare slow path: large and not 128-divisible -> pad to a lane-dense slab
    # (one extra HBM pass for pad + one for the slice back).
    lane = 1024
    chunk = sublane * lane
    n_pad = pl.cdiv(n, chunk) * chunk
    flat = jnp.pad(x.reshape(-1), (0, n_pad - n))
    rows = n_pad // lane
    block_rows = min(rows, _target_block_rows(lane, itemsize, sublane))
    out = _copy_slab(flat.reshape(rows, lane), block_rows, lane)
    return out.reshape(-1)[:n].reshape(x.shape)


# Donate x so XLA can alias the input HBM buffer straight through to the
# output (theoretical optimum for identity: no second HBM allocation).
identity_forward = jax.jit(_identity_forward_impl, donate_argnums=0)


if __name__ == "__main__":
    key = jax.random.PRNGKey(0)
    # Small NCHW input consistent with typical conv-module usage.
    x = jax.random.normal(key, (2, 4, 16, 16), dtype=jnp.float32)

    # Keep a host copy / metadata for verification (x is donated to the call).
    x_host = np.asarray(x)
    orig_shape, orig_dtype = x.shape, x.dtype

    y = identity_forward(x)
    y = jax.block_until_ready(y)

    assert y.shape == orig_shape, (y.shape, orig_shape)
    assert y.dtype == orig_dtype, (y.dtype, orig_dtype)
    assert np.array_equal(np.asarray(y), x_host), "Identity kernel output mismatch"

    print("KERNEL_OK")
</pallas_src>

<mosaic_0001>
module attributes {stable_mosaic.version = 11 : i64} {
  func.func @_identity_kernel(%arg0: i32, %arg1: memref<1x2048xf32, #tpu.memory_space<vmem>>, %arg2: memref<1x2048xf32, #tpu.memory_space<vmem>>) attributes {dimension_semantics = [#tpu.dimension_semantics<parallel>], iteration_bounds = array<i64: 1>, scalar_prefetch = 0 : i64, scratch_operands = 0 : i64, tpu.core_type = #tpu.core_type<tc>, window_params = [{transform_indices = @transform_0, window_bounds = array<i64: 1, 2048>}, {transform_indices = @transform_1, window_bounds = array<i64: 1, 2048>}]} {
    %c0 = arith.constant 0 : index
    %c0_0 = arith.constant 0 : index
    %0 = vector.load %arg1[%c0, %c0_0] : memref<1x2048xf32, #tpu.memory_space<vmem>>, vector<1x2048xf32>
    %c0_1 = arith.constant 0 : index
    %c0_2 = arith.constant 0 : index
    %1 = vector.load %arg2[%c0_1, %c0_2] : memref<1x2048xf32, #tpu.memory_space<vmem>>, vector<1x2048xf32>
    tpu.vector_store %arg2[%c0_1, %c0_2], %0 {strides = array<i32>} : memref<1x2048xf32, #tpu.memory_space<vmem>>, vector<1x2048xf32>,
    return
  }
  func.func @transform_0(%arg0: i32) -> (i32, i32) {
    %c0_i32 = arith.constant 0 : i32
    %c0_i32_0 = arith.constant 0 : i32
    return %arg0, %c0_i32 : i32, i32
  }
  func.func @transform_1(%arg0: i32) -> (i32, i32) {
    %c0_i32 = arith.constant 0 : i32
    %c0_i32_0 = arith.constant 0 : i32
    return %arg0, %c0_i32 : i32, i32
  }
}

</mosaic_0001>

<llo_original>
// kernel: _identity_forward_impl.1
$region0: #{_identity_forward_impl.1}
  #allocation0 [shape = 'u32[]', space=smem, size = 0x4, offset = 0x4, fixed_abs, tag = 'smem constant byte address 0x4 - core index']
  #allocation1 [shape = 'u32[144,128]{1,0:T(1,128)}', space=vmem, size = 0x12000, scoped, tag = 'internal scratch']
  %s0 = inlined_call_operand.vmem [shape: f32[1,2048], index: 0, kind: input, shape index: {}, may-alias: {0,1}]
  %s1 = inlined_call_operand.vmem [shape: f32[1,2048], index: 1, kind: output, shape index: {}, may-alias: {0,1}]
  %s2 = sld [smem:[#allocation0]]
  $region14: #{_identity_forward_impl.1} parent=0
    _
  %s4 = ssub.s32 1, %s2
  %s5 = scalar_select 0, %s4, %s2
  // Predicated region
  $region2: #{_identity_forward_impl.1} parent=0 // pred_check
    _
  $region3: #{_identity_forward_impl.1} parent=0 // pred_check_branch
    %7 = sbr.rel (0) target = $region5
  $region4: #{_identity_forward_impl.1} parent=0 // pred_region
    _
  $region5: #{_identity_forward_impl.1} parent=0 // pred_fallthru
    _
  %v8 = vld [vmem:[%s0] sm:$0xff]
  %v9 = vld [vmem:[%s0 + $0x8] sm:$0xff]
  %10 = vst [vmem:[%s1] sm:$0xff] %v8
  %11 = vst [vmem:[%s1 + $0x8] sm:$0xff] %v9
  // Predicated region
  $region6: #{_identity_forward_impl.1} parent=0 // pred_check
    _
  $region7: #{_identity_forward_impl.1} parent=0 // pred_check_branch
    %13 = sbr.rel (0) target = $region9
  $region8: #{_identity_forward_impl.1} parent=0 // pred_region
    _
  $region9: #{_identity_forward_impl.1} parent=0 // pred_fallthru
    _
  // Predicated region
  $region10: #{_identity_forward_impl.1} parent=0 // pred_check
    _
  $region11: #{_identity_forward_impl.1} parent=0 // pred_check_branch
    %15 = sbr.rel (0) target = $region13
  $region12: #{_identity_forward_impl.1} parent=0 // pred_region
    _
  $region13: #{_identity_forward_impl.1} parent=0 // pred_fallthru
    _

</llo_original>
